<compile_context>
chip_gen: v5e
topology: v5e:2x2
jax: 0.10.0
libtpu: 0.0.40
codegen_flags: <defaults>
</compile_context>

<pallas_src>
import functools

import jax
import jax.numpy as jnp
from jax.experimental import pallas as pl
from jax.experimental.pallas import tpu as pltpu


def _avg_channel_attention_kernel(x_ref, w1_ref, b1_ref, w2_ref, b2_ref,
                                  o_ref, acc_ref, *, inv_hw, hw_total, thw,
                                  mask_last):
    # x_ref:  (tn, C, THW)  native dtype
    # w1_ref: (C, Cmid)  BN1 scale pre-folded     b1_ref: (1, Cmid)
    # w2_ref: (Cmid, C)  BN2 scale pre-folded     b2_ref: (1, C)
    # o_ref:  (tn, 1, C)                          acc_ref: (tn, C) f32 scratch
    hw_id = pl.program_id(1)
    n_hw = pl.num_programs(1)

    @pl.when(hw_id == 0)
    def _():
        acc_ref[...] = jnp.zeros_like(acc_ref)

    x = x_ref[...].astype(jnp.float32)                                # (tn, C, THW)

    if mask_last:
        # Full interior tiles: plain lane reduction.
        @pl.when(hw_id < n_hw - 1)
        def _():
            acc_ref[...] += jnp.sum(x, axis=-1)

        # Ragged final tile: lanes past the true spatial extent hold
        # unspecified edge-block padding -> zero them before the sum.
        @pl.when(hw_id == n_hw - 1)
        def _():
            lane = jax.lax.broadcasted_iota(jnp.int32, x.shape, 2)
            valid = lane < (hw_total - hw_id * thw)
            acc_ref[...] += jnp.sum(jnp.where(valid, x, 0.0), axis=-1)
    else:
        acc_ref[...] += jnp.sum(x, axis=-1)

    @pl.when(hw_id == n_hw - 1)
    def _():
        pooled = acc_ref[...] * inv_hw                                # (tn, C)
        # Conv2d(C -> Cmid, 1x1) on a 1x1 map == matmul; BN1 scale folded in w1.
        h = jnp.dot(pooled, w1_ref[...], preferred_element_type=jnp.float32)
        h = jnp.maximum(h + b1_ref[...], 0.0)                         # BN bias + ReLU
        # Conv2d(Cmid -> C, 1x1); BN2 scale folded in w2.
        y = jnp.dot(h, w2_ref[...], preferred_element_type=jnp.float32)
        y = jax.nn.sigmoid(y + b2_ref[...])                           # BN bias + Sigmoid
        o_ref[...] = y[:, None, :].astype(o_ref.dtype)


def _choose_tiling(N, C, HW, itemsize, max_block_bytes):
    """Pick (tn, THW) for (tn, C, THW) x blocks under a VMEM byte budget."""
    LANE = 128
    # Batch tile: divisor of N, kept <= N//2 (when N >= 2) so the 'parallel'
    # batch grid axis has >= 2 blocks -> both v7x TensorCores get fed.  Also
    # small enough that a single 128-lane column already fits the budget.
    tn_cap = N if N < 2 else N // 2
    tn = 1
    for d in range(1, N + 1):
        if N % d == 0 and d <= tn_cap and d * C * LANE * itemsize <= max_block_bytes:
            tn = d
    # Spatial tile: largest multiple of 128 lanes within budget (>= 128).
    lanes = max(1, max_block_bytes // (tn * C * LANE * itemsize))
    THW = lanes * LANE
    if THW >= HW:
        THW = HW          # whole (unpadded) spatial axis in a single block
    return tn, THW


def avg_channel_attention(x_nchw, w1, w2,
                          bn1_gamma, bn1_beta, bn1_mean, bn1_var,
                          bn2_gamma, bn2_beta, bn2_mean, bn2_var,
                          eps=1e-5, max_block_bytes=8 * 1024 * 1024):
    """x_nchw: (N, C, H, W).  Returns (N, C, 1, 1) attention weights (f32)."""
    N, C, H, W = x_nchw.shape
    Cmid = w1.shape[0]
    HW = H * W
    itemsize = jnp.dtype(x_nchw.dtype).itemsize

    tn, THW = _choose_tiling(N, C, HW, itemsize, max_block_bytes)
    n_n = N // tn
    n_hw = pl.cdiv(HW, THW)
    mask_last = (HW % THW) != 0

    # x streamed in native dtype; the (N,C,H,W)->(N,C,HW) reshape is free.
    x_flat = x_nchw.reshape(N, C, HW)

    # --- Fold BN running stats (inference mode) into the 1x1-conv weights. ---
    w1t = jnp.transpose(w1.reshape(Cmid, C)).astype(jnp.float32)   # (C, Cmid)
    w2t = jnp.transpose(w2.reshape(C, Cmid)).astype(jnp.float32)   # (Cmid, C)
    s1 = (bn1_gamma / jnp.sqrt(bn1_var + eps)).astype(jnp.float32)
    s2 = (bn2_gamma / jnp.sqrt(bn2_var + eps)).astype(jnp.float32)
    w1s = w1t * s1[None, :]                                        # (C, Cmid)
    w2s = w2t * s2[None, :]                                        # (Cmid, C)
    b1 = (bn1_beta.astype(jnp.float32) - bn1_mean * s1).reshape(1, Cmid)
    b2 = (bn2_beta.astype(jnp.float32) - bn2_mean * s2).reshape(1, C)

    # --- Explicit VMEM limit: double-buffered x blocks + scratch + params. ---
    block_bytes = tn * C * THW * itemsize
    need = (2 * block_bytes                       # double-buffered x
            + 3 * tn * C * 4                      # acc scratch + out buffers
            + 2 * (2 * C * Cmid + Cmid + C) * 4)  # folded weights / biases
    vmem_limit = int(max(32 * 1024 * 1024, need + (4 << 20)))

    kernel = functools.partial(_avg_channel_attention_kernel,
                               inv_hw=float(1.0 / HW), hw_total=HW, thw=THW,
                               mask_last=mask_last)

    out = pl.pallas_call(
        kernel,
        out_shape=jax.ShapeDtypeStruct((N, 1, C), jnp.float32),
        grid=(n_n, n_hw),
        in_specs=[
            pl.BlockSpec((tn, C, THW), lambda n, h: (n, 0, h)),    # streamed x
            pl.BlockSpec((C, Cmid), lambda n, h: (0, 0)),          # w1 (BN folded)
            pl.BlockSpec((1, Cmid), lambda n, h: (0, 0)),          # b1
            pl.BlockSpec((Cmid, C), lambda n, h: (0, 0)),          # w2 (BN folded)
            pl.BlockSpec((1, C), lambda n, h: (0, 0)),             # b2
        ],
        out_specs=pl.BlockSpec((tn, 1, C), lambda n, h: (n, 0, 0)),
        scratch_shapes=[pltpu.VMEM((tn, C), jnp.float32)],
        compiler_params=pltpu.CompilerParams(
            dimension_semantics=("parallel", "arbitrary"),
            vmem_limit_bytes=vmem_limit),
        cost_estimate=pl.CostEstimate(
            flops=int(N * C * HW + 4 * N * C * Cmid),
            transcendentals=int(N * C),
            bytes_accessed=int(N * C * HW * itemsize + N * C * 4
                               + (2 * C * Cmid + Cmid + C) * 4),
        ),
    )(x_flat, w1s, b1, w2s, b2)

    return out.reshape(N, C, 1, 1)


def _reference(x_nchw, w1, w2, g1, be1, m1, v1, g2, be2, m2, v2, eps=1e-5):
    N, C, H, W = x_nchw.shape
    Cmid = w1.shape[0]
    pooled = jnp.mean(x_nchw.astype(jnp.float32), axis=(2, 3))     # (N, C)
    h = pooled @ w1.reshape(Cmid, C).T
    h = (h - m1) / jnp.sqrt(v1 + eps) * g1 + be1
    h = jnp.maximum(h, 0.0)
    y = h @ w2.reshape(C, Cmid).T
    y = (y - m2) / jnp.sqrt(v2 + eps) * g2 + be2
    return jax.nn.sigmoid(y).reshape(N, C, 1, 1)


if __name__ == "__main__":
    key = jax.random.PRNGKey(0)
    N, C, r = 2, 16, 4
    Cmid = C // r
    ks = jax.random.split(key, 9)

    # Deterministic synthetic parameters (shapes per module __init__).
    w1 = jax.random.normal(ks[1], (Cmid, C, 1, 1), dtype=jnp.float32) * 0.1
    w2 = jax.random.normal(ks[2], (C, Cmid, 1, 1), dtype=jnp.float32) * 0.1
    bn1_gamma = 1.0 + 0.1 * jax.random.normal(ks[3], (Cmid,), dtype=jnp.float32)
    bn1_beta = 0.05 * jax.random.normal(ks[4], (Cmid,), dtype=jnp.float32)
    bn1_mean = 0.01 * jnp.arange(Cmid, dtype=jnp.float32)
    bn1_var = jnp.ones((Cmid,), dtype=jnp.float32) * 0.9
    bn2_gamma = 1.0 + 0.1 * jax.random.normal(ks[5], (C,), dtype=jnp.float32)
    bn2_beta = 0.05 * jax.random.normal(ks[6], (C,), dtype=jnp.float32)
    bn2_mean = 0.01 * jnp.arange(C, dtype=jnp.float32)
    bn2_var = jnp.ones((C,), dtype=jnp.float32) * 1.1
    bn_args = (bn1_gamma, bn1_beta, bn1_mean, bn1_var,
               bn2_gamma, bn2_beta, bn2_mean, bn2_var)

    # Case 1: whole spatial extent fits a single block (no-mask fast path).
    x1 = jax.random.normal(ks[0], (N, C, 16, 16), dtype=jnp.float32)
    out1 = jax.block_until_ready(avg_channel_attention(x1, w1, w2, *bn_args))
    ref1 = _reference(x1, w1, w2, *bn_args)
    assert out1.shape == (N, C, 1, 1)
    assert jnp.max(jnp.abs(out1 - ref1)) < 1e-5

    # Case 2: tiny block budget forces multiple HW tiles with a ragged,
    # in-kernel-masked last tile (exercises the cdiv-grid path).
    x2 = jax.random.normal(ks[7], (N, C, 20, 20), dtype=jnp.float32)
    out2 = jax.block_until_ready(
        avg_channel_attention(x2, w1, w2, *bn_args, max_block_bytes=8 * 1024))
    ref2 = _reference(x2, w1, w2, *bn_args)
    assert out2.shape == (N, C, 1, 1)
    assert jnp.max(jnp.abs(out2 - ref2)) < 1e-5

    print("KERNEL_OK")
</pallas_src>

<mosaic_0001>
module attributes {stable_mosaic.version = 11 : i64} {
  func.func @_avg_channel_attention_kernel(%arg0: i32, %arg1: i32, %arg2: memref<1x16x256xf32, #tpu.memory_space<vmem>>, %arg3: memref<16x4xf32, #tpu.memory_space<vmem>>, %arg4: memref<1x4xf32, #tpu.memory_space<vmem>>, %arg5: memref<4x16xf32, #tpu.memory_space<vmem>>, %arg6: memref<1x16xf32, #tpu.memory_space<vmem>>, %arg7: memref<1x1x16xf32, #tpu.memory_space<vmem>>, %arg8: memref<1x16xf32, #tpu.memory_space<vmem>>) attributes {dimension_semantics = [#tpu.dimension_semantics<parallel>, #tpu.dimension_semantics<arbitrary>], iteration_bounds = array<i64: 2, 1>, scalar_prefetch = 0 : i64, scratch_operands = 1 : i64, tpu.core_type = #tpu.core_type<tc>, window_params = [{transform_indices = @transform_0, window_bounds = array<i64: 1, 16, 256>}, {pipeline_mode = #tpu.pipeline_mode<synchronous>, transform_indices = @transform_1, window_bounds = array<i64: 16, 4>}, {pipeline_mode = #tpu.pipeline_mode<synchronous>, transform_indices = @transform_2, window_bounds = array<i64: 1, 4>}, {pipeline_mode = #tpu.pipeline_mode<synchronous>, transform_indices = @transform_3, window_bounds = array<i64: 4, 16>}, {pipeline_mode = #tpu.pipeline_mode<synchronous>, transform_indices = @transform_4, window_bounds = array<i64: 1, 16>}, {transform_indices = @transform_5, window_bounds = array<i64: 1, 1, 16>}]} {
    %c0_i32 = arith.constant 0 : i32
    %0 = arith.cmpi eq, %arg1, %c0_i32 : i32
    %1 = arith.extui %0 : i1 to i32
    %c0_i32_0 = arith.constant 0 : i32
    %2 = arith.cmpi ne, %1, %c0_i32_0 : i32
    scf.if %2 {
      %cst_9 = arith.constant 0.000000e+00 : f32
      %11 = vector.broadcast %cst_9 : f32 to vector<1x16xf32>
      %c0_10 = arith.constant 0 : index
      %c0_11 = arith.constant 0 : index
      %12 = vector.load %arg8[%c0_10, %c0_11] : memref<1x16xf32, #tpu.memory_space<vmem>>, vector<1x16xf32>
      tpu.vector_store %arg8[%c0_10, %c0_11], %11 {strides = array<i32>} : memref<1x16xf32, #tpu.memory_space<vmem>>, vector<1x16xf32>,
    } else {
    }
    %c0 = arith.constant 0 : index
    %c0_1 = arith.constant 0 : index
    %c0_2 = arith.constant 0 : index
    %3 = vector.load %arg2[%c0, %c0_1, %c0_2] : memref<1x16x256xf32, #tpu.memory_space<vmem>>, vector<1x16x256xf32>
    %c0_3 = arith.constant 0 : index
    %c0_4 = arith.constant 0 : index
    %4 = vector.load %arg8[%c0_3, %c0_4] : memref<1x16xf32, #tpu.memory_space<vmem>>, vector<1x16xf32>
    %cst = arith.constant dense<0.000000e+00> : vector<1x16xf32>
    %5 = vector.multi_reduction <add>, %3, %cst [2] : vector<1x16x256xf32> to vector<1x16xf32>
    %6 = arith.addf %4, %5 : vector<1x16xf32>
    %c0_5 = arith.constant 0 : index
    %c0_6 = arith.constant 0 : index
    %7 = vector.load %arg8[%c0_5, %c0_6] : memref<1x16xf32, #tpu.memory_space<vmem>>, vector<1x16xf32>
    tpu.vector_store %arg8[%c0_5, %c0_6], %6 {strides = array<i32>} : memref<1x16xf32, #tpu.memory_space<vmem>>, vector<1x16xf32>,
    %c0_i32_7 = arith.constant 0 : i32
    %8 = arith.cmpi eq, %arg1, %c0_i32_7 : i32
    %9 = arith.extui %8 : i1 to i32
    %c0_i32_8 = arith.constant 0 : i32
    %10 = arith.cmpi ne, %9, %c0_i32_8 : i32
    scf.if %10 {
      %c0_9 = arith.constant 0 : index
      %c0_10 = arith.constant 0 : index
      %11 = vector.load %arg8[%c0_9, %c0_10] : memref<1x16xf32, #tpu.memory_space<vmem>>, vector<1x16xf32>
      %cst_11 = arith.constant 3.906250e-03 : f32
      %12 = vector.broadcast %cst_11 : f32 to vector<1x16xf32>
      %13 = arith.mulf %11, %12 : vector<1x16xf32>
      %c0_12 = arith.constant 0 : index
      %c0_13 = arith.constant 0 : index
      %14 = vector.load %arg3[%c0_12, %c0_13] : memref<16x4xf32, #tpu.memory_space<vmem>>, vector<16x4xf32>
      %cst_14 = arith.constant dense<0.000000e+00> : vector<1x4xf32>
      %15 = tpu.matmul %13, %14, %cst_14 {dimension_numbers = #tpu.dot_dimension_numbers<[1], [0], [0], [1], [0, 0, 1, 1], [], []>} : vector<1x16xf32>, vector<16x4xf32>, vector<1x4xf32> -> vector<1x4xf32>
      %c0_15 = arith.constant 0 : index
      %c0_16 = arith.constant 0 : index
      %16 = vector.load %arg4[%c0_15, %c0_16] : memref<1x4xf32, #tpu.memory_space<vmem>>, vector<1x4xf32>
      %17 = arith.addf %15, %16 : vector<1x4xf32>
      %cst_17 = arith.constant 0.000000e+00 : f32
      %18 = vector.broadcast %cst_17 : f32 to vector<1x4xf32>
      %19 = arith.maximumf %17, %18 : vector<1x4xf32>
      %c0_18 = arith.constant 0 : index
      %c0_19 = arith.constant 0 : index
      %20 = vector.load %arg5[%c0_18, %c0_19] : memref<4x16xf32, #tpu.memory_space<vmem>>, vector<4x16xf32>
      %cst_20 = arith.constant dense<0.000000e+00> : vector<1x16xf32>
      %21 = tpu.matmul %19, %20, %cst_20 {dimension_numbers = #tpu.dot_dimension_numbers<[1], [0], [0], [1], [0, 0, 1, 1], [], []>} : vector<1x4xf32>, vector<4x16xf32>, vector<1x16xf32> -> vector<1x16xf32>
      %c0_21 = arith.constant 0 : index
      %c0_22 = arith.constant 0 : index
      %22 = vector.load %arg6[%c0_21, %c0_22] : memref<1x16xf32, #tpu.memory_space<vmem>>, vector<1x16xf32>
      %23 = arith.addf %21, %22 : vector<1x16xf32>
      %24 = arith.negf %23 : vector<1x16xf32>
      %25 = math.exp %24 : vector<1x16xf32>
      %cst_23 = arith.constant 1.000000e+00 : f32
      %26 = vector.broadcast %cst_23 : f32 to vector<1x16xf32>
      %27 = arith.addf %26, %25 : vector<1x16xf32>
      %28 = arith.divf %26, %27 : vector<1x16xf32>
      %29 = vector.shape_cast %28 : vector<1x16xf32> to vector<1x1x16xf32>
      %c0_24 = arith.constant 0 : index
      %c0_25 = arith.constant 0 : index
      %c0_26 = arith.constant 0 : index
      %30 = vector.load %arg7[%c0_24, %c0_25, %c0_26] : memref<1x1x16xf32, #tpu.memory_space<vmem>>, vector<1x1x16xf32>
      tpu.vector_store %arg7[%c0_24, %c0_25, %c0_26], %29 {strides = array<i32>} : memref<1x1x16xf32, #tpu.memory_space<vmem>>, vector<1x1x16xf32>,
    } else {
    }
    return
  }
  func.func @transform_0(%arg0: i32, %arg1: i32) -> (i32, i32, i32) {
    %c0_i32 = arith.constant 0 : i32
    %c0_i32_0 = arith.constant 0 : i32
    return %arg0, %c0_i32, %arg1 : i32, i32, i32
  }
  func.func @transform_1(%arg0: i32, %arg1: i32) -> (i32, i32) {
    %c0_i32 = arith.constant 0 : i32
    %c0_i32_0 = arith.constant 0 : i32
    %c0_i32_1 = arith.constant 0 : i32
    return %c0_i32, %c0_i32_0 : i32, i32
  }
  func.func @transform_2(%arg0: i32, %arg1: i32) -> (i32, i32) {
    %c0_i32 = arith.constant 0 : i32
    %c0_i32_0 = arith.constant 0 : i32
    %c0_i32_1 = arith.constant 0 : i32
    return %c0_i32, %c0_i32_0 : i32, i32
  }
  func.func @transform_3(%arg0: i32, %arg1: i32) -> (i32, i32) {
    %c0_i32 = arith.constant 0 : i32
    %c0_i32_0 = arith.constant 0 : i32
    %c0_i32_1 = arith.constant 0 : i32
    return %c0_i32, %c0_i32_0 : i32, i32
  }
  func.func @transform_4(%arg0: i32, %arg1: i32) -> (i32, i32) {
    %c0_i32 = arith.constant 0 : i32
    %c0_i32_0 = arith.constant 0 : i32
    %c0_i32_1 = arith.constant 0 : i32
    return %c0_i32, %c0_i32_0 : i32, i32
  }
  func.func @transform_5(%arg0: i32, %arg1: i32) -> (i32, i32, i32) {
    %c0_i32 = arith.constant 0 : i32
    %c0_i32_0 = arith.constant 0 : i32
    %c0_i32_1 = arith.constant 0 : i32
    return %arg0, %c0_i32, %c0_i32_0 : i32, i32, i32
  }
}

</mosaic_0001>

<llo_original>
// kernel: tpu_custom_call.1
$region0: #{tpu_custom_call.1}
  #allocation0 [shape = 'u32[]', space=smem, size = 0x4, offset = 0x4, fixed_abs, tag = 'smem constant byte address 0x4 - core index']
  #allocation1 [shape = 'u32[72,128]{1,0:T(1,128)}', space=vmem, size = 0x9000, scoped, tag = 'internal scratch']
  #allocation2 [shape = 'f32[1,16]{1,0:T(1,128)}', space=vmem, size = 0x200, scoped, tag = 'scratch operand']
  %s0 = inlined_call_operand.hbm [shape: f32[2,16,256], index: 0, kind: input, shape index: {}]
  %s1 = inlined_call_operand.vmem [shape: f32[16,4], index: 1, kind: input, shape index: {}]
  %s2 = inlined_call_operand.vmem [shape: f32[1,4], index: 2, kind: input, shape index: {}]
  %s3 = inlined_call_operand.vmem [shape: f32[4,16], index: 3, kind: input, shape index: {}]
  %s4 = inlined_call_operand.vmem [shape: f32[1,16], index: 4, kind: input, shape index: {}]
  %s5 = inlined_call_operand.hbm [shape: f32[2,1,16], index: 5, kind: output, shape index: {}]
  %s6 = sld [smem:[#allocation0]]
  $region65: #{tpu_custom_call.1} parent=0
    _
  %s8 = ssub.s32 1, %s6
  %s9 = scalar_select 0, %s8, %s6
  $region1: #{tpu_custom_call.1} parent=0
    #allocation3 [shape = 'u8[32768]{0}', space=vmem, size = 0x8000, scoped, tag = 'input window, operand 0']
    #allocation4 [shape = 's32[2]{0}', space=sflag, size = 0x8, scoped, tag = 'scoped memory for tpu_custom_call.1']
    #allocation5 [shape = 's32[2]{0}', space=sflag, size = 0x8, scoped, tag = 'scoped memory for tpu_custom_call.1']
    #allocation6 [shape = 'u8[1024]{0}', space=vmem, size = 0x400, scoped, tag = 'output window, operand 0']
    %10 = vsyncpa [#allocation4], 0
    %s11 = scalar_lea.sflag [#allocation4], 1
    %12 = vsyncpa %s11, 0
    %13 = vsyncpa [#allocation5], 0
    %s14 = scalar_lea.sflag [#allocation5], 1
    %15 = vsyncpa %s14, 0
    loop: start=0, step=1, limit=4
    $region2: #{tpu_custom_call.1} parent=1 // loop_pre_header
      _
    $region3: #{tpu_custom_call.1} parent=1 // loop_header
      %s17 = sphi 0, %s21
      %p18 = scmp.ge.s32.totalorder %s17, 4
      %s24 = sphi 0, %s36
      %s25 = sphi 0, %s32
      %s26 = sphi 0, %s24
      %s27 = sphi 0, %s25
      %s28 = sphi 0, %s26
      %s29 = sphi 0, %s27
      %s41 = sphi 0, %s43
      %s44 = sphi 0, %s41
      %s45 = sphi 0, %s44
      %s61 = sphi 0, %s45
      %s65 = sphi 0, %s65
      %s67 = sphi 0, %s65
      %s68 = sphi 0, %s67
      %s82 = sphi 0, %s68
      %s86 = sphi 0, %s86
      %s88 = sphi 0, %s86
      %s89 = sphi 0, %s88
      %s103 = sphi 0, %s89
      %s107 = sphi 0, %s107
      %s109 = sphi 0, %s107
      %s110 = sphi 0, %s109
      %s124 = sphi 0, %s110
      %s128 = sphi 0, %s128
      %s130 = sphi 0, %s128
      %s131 = sphi 0, %s130
      %s145 = sphi 0, %s131
      %s151 = sphi 0, %s153
      %s154 = sphi 0, %s151
      %s155 = sphi 0, %s154
      %s171 = sphi 0, %s155
    $region4: #{tpu_custom_call.1} parent=1 // loop_header_branch
      %20 = sbr.rel (%p18) target = $region8
    $region5: #{tpu_custom_call.1} parent=1 // loop_body
      %s22 = ssub.s32 %s17, 1
      %s23 = ssub.s32 %s17, 2
      %s30 = sadd.s32 1, %s25
      %p31 = scmp.ge.s32.totalorder %s30, 1
      %s32 = scalar_select %p31, 0, %s30
      %s33 = sadd.s32 1, %s24
      %s34 = scalar_select %p31, %s33, %s24
      %p35 = scmp.ge.s32.totalorder %s34, 2
      %s36 = scalar_select %p35, 0, %s34
      %s37 = ssub.s32 %s24, %s36
      %s38 = ssub.s32 %s25, %s32
      %s39 = sor.u32 %s37, %s38
      %p40 = scmp.eq.s32.totalorder %s39, 0
      %s42 = sadd.s32 %s41, 1
      %s43 = scalar_select %p40, %s41, %s42
      %p46 = pneg %p40
      %p47 = scmp.eq.s32.totalorder %s17, 1
      %p48 = por %p46, %p47
      %p49 = scmp.ne.s32.totalorder %s41, %s44
      %p50 = scmp.eq.s32.totalorder %s17, 0
      %p51 = por %p49, %p50
      %p52 = scmp.ne.s32.totalorder %s41, %s44
      %p53 = scmp.eq.s32.totalorder %s22, 1
      %p54 = por %p52, %p53
      %p55 = scmp.ne.s32.totalorder %s44, %s45
      %p56 = scmp.eq.s32.totalorder %s22, 0
      %p57 = por %p55, %p56
      %p58 = scmp.ne.s32.totalorder %s44, %s45
      %p59 = scmp.eq.s32.totalorder %s23, 1
      %p60 = por %p58, %p59
      %p62 = scmp.ne.s32.totalorder %s45, %s61
      %p63 = scmp.eq.s32.totalorder %s23, 0
      %p64 = por %p62, %p63
      %s66 = sadd.s32 %s65, 1
      %p69 = scmp.eq.s32.totalorder %s17, 1
      %p70 = scmp.ne.s32.totalorder %s65, %s67
      %p71 = scmp.eq.s32.totalorder %s17, 0
      %p72 = por %p70, %p71
      %p73 = scmp.ne.s32.totalorder %s65, %s67
      %p74 = scmp.eq.s32.totalorder %s22, 1
      %p75 = por %p73, %p74
      %p76 = scmp.ne.s32.totalorder %s67, %s68
      %p77 = scmp.eq.s32.totalorder %s22, 0
      %p78 = por %p76, %p77
      %p79 = scmp.ne.s32.totalorder %s67, %s68
      %p80 = scmp.eq.s32.totalorder %s23, 1
      %p81 = por %p79, %p80
      %p83 = scmp.ne.s32.totalorder %s68, %s82
      %p84 = scmp.eq.s32.totalorder %s23, 0
      %p85 = por %p83, %p84
      %s87 = sadd.s32 %s86, 1
      %p90 = scmp.eq.s32.totalorder %s17, 1
      %p91 = scmp.ne.s32.totalorder %s86, %s88
      %p92 = scmp.eq.s32.totalorder %s17, 0
      %p93 = por %p91, %p92
      %p94 = scmp.ne.s32.totalorder %s86, %s88
      %p95 = scmp.eq.s32.totalorder %s22, 1
      %p96 = por %p94, %p95
      %p97 = scmp.ne.s32.totalorder %s88, %s89
      %p98 = scmp.eq.s32.totalorder %s22, 0
      %p99 = por %p97, %p98
      %p100 = scmp.ne.s32.totalorder %s88, %s89
      %p101 = scmp.eq.s32.totalorder %s23, 1
      %p102 = por %p100, %p101
      %p104 = scmp.ne.s32.totalorder %s89, %s103
      %p105 = scmp.eq.s32.totalorder %s23, 0
      %p106 = por %p104, %p105
      %s108 = sadd.s32 %s107, 1
      %p111 = scmp.eq.s32.totalorder %s17, 1
      %p112 = scmp.ne.s32.totalorder %s107, %s109
      %p113 = scmp.eq.s32.totalorder %s17, 0
      %p114 = por %p112, %p113
      %p115 = scmp.ne.s32.totalorder %s107, %s109
      %p116 = scmp.eq.s32.totalorder %s22, 1
      %p117 = por %p115, %p116
      %p118 = scmp.ne.s32.totalorder %s109, %s110
      %p119 = scmp.eq.s32.totalorder %s22, 0
      %p120 = por %p118, %p119
      %p121 = scmp.ne.s32.totalorder %s109, %s110
      %p122 = scmp.eq.s32.totalorder %s23, 1
      %p123 = por %p121, %p122
      %p125 = scmp.ne.s32.totalorder %s110, %s124
      %p126 = scmp.eq.s32.totalorder %s23, 0
      %p127 = por %p125, %p126
      %s129 = sadd.s32 %s128, 1
      %p132 = scmp.eq.s32.totalorder %s17, 1
      %p133 = scmp.ne.s32.totalorder %s128, %s130
      %p134 = scmp.eq.s32.totalorder %s17, 0
      %p135 = por %p133, %p134
      %p136 = scmp.ne.s32.totalorder %s128, %s130
      %p137 = scmp.eq.s32.totalorder %s22, 1
      %p138 = por %p136, %p137
      %p139 = scmp.ne.s32.totalorder %s130, %s131
      %p140 = scmp.eq.s32.totalorder %s22, 0
      %p141 = por %p139, %p140
      %p142 = scmp.ne.s32.totalorder %s130, %s131
      %p143 = scmp.eq.s32.totalorder %s23, 1
      %p144 = por %p142, %p143
      %p146 = scmp.ne.s32.totalorder %s131, %s145
      %p147 = scmp.eq.s32.totalorder %s23, 0
      %p148 = por %p146, %p147
      %s149 = ssub.s32 %s24, %s36
      %p150 = scmp.eq.s32.totalorder %s149, 0
      %s152 = sadd.s32 %s151, 1
      %s153 = scalar_select %p150, %s151, %s152
      %p156 = pneg %p150
      %p157 = scmp.eq.s32.totalorder %s17, 1
      %p158 = por %p156, %p157
      %p159 = scmp.ne.s32.totalorder %s151, %s154
      %p160 = scmp.eq.s32.totalorder %s17, 0
      %p161 = por %p159, %p160
      %p162 = scmp.ne.s32.totalorder %s151, %s154
      %p163 = scmp.eq.s32.totalorder %s22, 1
      %p164 = por %p162, %p163
      %p165 = scmp.ne.s32.totalorder %s154, %s155
      %p166 = scmp.eq.s32.totalorder %s22, 0
      %p167 = por %p165, %p166
      %p168 = scmp.ne.s32.totalorder %s154, %s155
      %p169 = scmp.eq.s32.totalorder %s23, 1
      %p170 = por %p168, %p169
      %p172 = scmp.ne.s32.totalorder %s155, %s171
      %p173 = scmp.eq.s32.totalorder %s23, 0
      %p174 = por %p172, %p173
      %p175 = scmp.le.s32.totalorder 1, %s17
      %p176 = scmp.lt.s32.totalorder %s17, 3
      %p177 = pnand %p175, %p176
      %p178 = pneg %p177
      // Predicated region
      $region9: #{tpu_custom_call.1} parent=5 // pred_check
        _
      $region10: #{tpu_custom_call.1} parent=5 // pred_check_branch
        %180 = sbr.rel (%p177) target = $region12
      $region11: #{tpu_custom_call.1} parent=5 // pred_region
        %s181 = ssub.s32 %s17, 1
        // Predicated region
        $region13: #{tpu_custom_call.1} parent=11 // pred_check
          %p182 = pneg %p78
        $region14: #{tpu_custom_call.1} parent=11 // pred_check_branch
          %184 = sbr.rel (%p182) target = $region16
        $region15: #{tpu_custom_call.1} parent=11 // pred_region
          _
        $region16: #{tpu_custom_call.1} parent=11 // pred_fallthru
          _
        // Predicated region
        $region17: #{tpu_custom_call.1} parent=11 // pred_check
          %p185 = pneg %p99
        $region18: #{tpu_custom_call.1} parent=11 // pred_check_branch
          %187 = sbr.rel (%p185) target = $region20
        $region19: #{tpu_custom_call.1} parent=11 // pred_region
          _
        $region20: #{tpu_custom_call.1} parent=11 // pred_fallthru
          _
        // Predicated region
        $region21: #{tpu_custom_call.1} parent=11 // pred_check
          %p188 = pneg %p120
        $region22: #{tpu_custom_call.1} parent=11 // pred_check_branch
          %190 = sbr.rel (%p188) target = $region24
        $region23: #{tpu_custom_call.1} parent=11 // pred_region
          _
        $region24: #{tpu_custom_call.1} parent=11 // pred_fallthru
          _
        // Predicated region
        $region25: #{tpu_custom_call.1} parent=11 // pred_check
          %p191 = pneg %p141
        $region26: #{tpu_custom_call.1} parent=11 // pred_check_branch
          %193 = sbr.rel (%p191) target = $region28
        $region27: #{tpu_custom_call.1} parent=11 // pred_region
          _
        $region28: #{tpu_custom_call.1} parent=11 // pred_fallthru
          _
      $region12: #{tpu_custom_call.1} parent=5 // pred_fallthru
        _
      %p194 = scmp.lt.s32.totalorder %s17, 2
      // Predicated region
      $region29: #{tpu_custom_call.1} parent=5 // pred_check
        %p195 = pneg %p194
      $region30: #{tpu_custom_call.1} parent=5 // pred_check_branch
        %197 = sbr.rel (%p195) target = $region32
      $region31: #{tpu_custom_call.1} parent=5 // pred_region
        // Predicated region
        $region33: #{tpu_custom_call.1} parent=31 // pred_check
          %p198 = pneg %p51
        $region34: #{tpu_custom_call.1} parent=31 // pred_check_branch
          %200 = sbr.rel (%p198) target = $region36
        $region35: #{tpu_custom_call.1} parent=31 // pred_region
          %s201 = sand.u32 %s41, 1
          %s202 = scalar_lea.sflag [#allocation4], %s201
          %s203 = sand.u32 %s41, 1
          %s204 = smul.addr %s203, 32
          %s205 = scalar_lea.vmem [#allocation3], %s204
          %s206 = smul.u32 2, %s25
          %208 = vsyncadd %s202, 0
          %s209 = smul.addr %s24, 4
          %s210 = sadd.s32 %s206, %s209
          %s211 = smul.addr %s210, 8
          %s212 = scalar_lea.hbm %s0, %s211
          %s213 = sshll.u32 %s212, 4
          %s214 = int_to_ptr.hbm [resolvable:$true] %s213
          %s215 = sshll.u32 %s205, 4
          %s216 = int_to_ptr.vmem [resolvable:$true] %s215
          %221 = dma.hbm_to_vmem [thread:$0]  %s214, 512, %s216, %s202, 256, 256, 16
        $region36: #{tpu_custom_call.1} parent=31 // pred_fallthru
          _
      $region32: #{tpu_custom_call.1} parent=5 // pred_fallthru
        _
      %p222 = scmp.le.s32.totalorder 1, %s17
      %p223 = scmp.lt.s32.totalorder %s17, 3
      %p224 = pnand %p222, %p223
      %p225 = pneg %p224
      // Predicated region
      $region37: #{tpu_custom_call.1} parent=5 // pred_check
        _
      $region38: #{tpu_custom_call.1} parent=5 // pred_check_branch
        %227 = sbr.rel (%p224) target = $region40
      $region39: #{tpu_custom_call.1} parent=5 // pred_region
        %s228 = ssub.s32 %s17, 1
        %s229 = sand.u32 %s44, 1
        %s230 = scalar_lea.sflag [#allocation4], %s229
        %s231 = sand.u32 %s44, 1
        %s232 = smul.addr %s231, 32
        %s233 = scalar_lea.vmem [#allocation3], %s232
        // Predicated region
        $region41: #{tpu_custom_call.1} parent=39 // pred_check
          %p234 = pneg %p57
        $region42: #{tpu_custom_call.1} parent=39 // pred_check_branch
          %236 = sbr.rel (%p234) target = $region44
        $region43: #{tpu_custom_call.1} parent=39 // pred_region
          %238 = dma.done %s230, 512
        $region44: #{tpu_custom_call.1} parent=39 // pred_fallthru
          _
        %s239 = sand.u32 %s44, 1
        %s240 = scalar_lea.sflag [#allocation4], %s239
        %s241 = sand.u32 %s44, 1
        %s242 = smul.addr %s241, 32
        %s243 = scalar_lea.vmem [#allocation3], %s242
        %p244 = pneg %p57
        %p245 = pneg %p54
        %p246 = pneg %p78
        %p247 = pneg %p75
        %p248 = pneg %p99
        %p249 = pneg %p96
        %p250 = pneg %p120
        %p251 = pneg %p117
        %p252 = pneg %p141
        %p253 = pneg %p138
        %p254 = pneg %p167
        %p255 = pneg %p164
        %s256 = sand.u32 %s154, 1
        %s257 = scalar_lea.sflag [#allocation5], %s256
        %s258 = sand.u32 %s154, 1
        %s259 = scalar_lea.vmem [#allocation6], %s258
        %s260 = smul.u32 2, %s27
        %p261 = scmp.eq.s32.totalorder %s27, 0
        // Predicated region
        $region45: #{tpu_custom_call.1} parent=39 // pred_check
          %p262 = pneg %p261
        $region46: #{tpu_custom_call.1} parent=39 // pred_check_branch
          %264 = sbr.rel (%p262) target = $region48
        $region47: #{tpu_custom_call.1} parent=39 // pred_region
          %vm265 = vcmask 122880
          %266 = vst.msk [vmem:[#allocation2] sm:$0x1] %vm265, 0.0
        $region48: #{tpu_custom_call.1} parent=39 // pred_fallthru
          _
        %v267 = vld [vmem:[%s233] sm:$0xff]
        %v268 = vld [vmem:[%s233 + $0x8] sm:$0xff]
        %v269 = vld [vmem:[%s233 + $0x10] sm:$0xff]
        %v270 = vld [vmem:[%s233 + $0x18] sm:$0xff]
        %v271 = vld [vmem:[#allocation2] sm:$0x1]
        %v272 = vadd.f32 %v267, %v268
        %273 = vadd.xlane.f32.xlu0 %v272
        %v274 = vpop.xlane.xlu0 %273
        %v275 = vadd.f32 %v269, %v270
        %276 = vadd.xlane.f32.xlu0 %v275
        %v277 = vpop.xlane.xlu0 %276
        %v280 = vperm.slane %v274, 0
        %v281 = vperm.slane %v274, 1
        %v282 = vperm.slane %v274, 2
        %v283 = vperm.slane %v274, 3
        %v284 = vperm.slane %v274, 4
        %v285 = vperm.slane %v274, 5
        %v286 = vperm.slane %v274, 6
        %v287 = vperm.slane %v274, 7
        %v288 = vperm.slane %v277, 0
        %v289 = vperm.slane %v277, 1
        %v290 = vperm.slane %v277, 2
        %v291 = vperm.slane %v277, 3
        %v292 = vperm.slane %v277, 4
        %v293 = vperm.slane %v277, 5
        %v294 = vperm.slane %v277, 6
        %v295 = vperm.slane %v277, 7
        %296 = vst [vmem:[#allocation1] ss:$9 sm:$0xff] %v280
        %s297 = scalar_lea.vmem [#allocation1], 1
        %298 = vst [vmem:[%s297] ss:$9 sm:$0xff] %v281
        %s299 = scalar_lea.vmem [#allocation1], 2
        %300 = vst [vmem:[%s299] ss:$9 sm:$0xff] %v282
        %s301 = scalar_lea.vmem [#allocation1], 3
        %302 = vst [vmem:[%s301] ss:$9 sm:$0xff] %v283
        %s303 = scalar_lea.vmem [#allocation1], 4
        %304 = vst [vmem:[%s303] ss:$9 sm:$0xff] %v284
        %s305 = scalar_lea.vmem [#allocation1], 5
        %306 = vst [vmem:[%s305] ss:$9 sm:$0xff] %v285
        %s307 = scalar_lea.vmem [#allocation1], 6
        %308 = vst [vmem:[%s307] ss:$9 sm:$0xff] %v286
        %s309 = scalar_lea.vmem [#allocation1], 7
        %310 = vst [vmem:[%s309] ss:$9 sm:$0xff] %v287
        %v311 = vld [vmem:[#allocation1] sm:$0xff]
        %312 = vst [vmem:[#allocation1] ss:$9 sm:$0xff] %v288
        %313 = vst [vmem:[%s297] ss:$9 sm:$0xff] %v289
        %314 = vst [vmem:[%s299] ss:$9 sm:$0xff] %v290
        %315 = vst [vmem:[%s301] ss:$9 sm:$0xff] %v291
        %316 = vst [vmem:[%s303] ss:$9 sm:$0xff] %v292
        %317 = vst [vmem:[%s305] ss:$9 sm:$0xff] %v293
        %318 = vst [vmem:[%s307] ss:$9 sm:$0xff] %v294
        %319 = vst [vmem:[%s309] ss:$9 sm:$0xff] %v295
        %v320 = vld [vmem:[#allocation1] sm:$0xff]
        %321 = vset.pattern.permute.xlu0 0
        %322 = vperm.xlu0 %321, %v311
        %v323 = vpop.permute.xlu0 %322
        %324 = vset.pattern.permute.xlu0 0
        %325 = vperm.xlu0 %324, %v320
        %v326 = vpop.permute.xlu0 %325
        %v327 = vlaneseq
        %v328 = vand.u32 %v327, 127
        %v329 = vperm.slane %v323, %v328
        %v330 = vadd.s32 %v328, 4294967288
        %v331 = vperm.slane %v326, %v330
        %vm332 = vcmask 130112
        %v333 = vsel %vm332, %v331, %v329
        %v335 = vadd.f32 %v271, %v333
        %vm336 = vcmask 122880
        %337 = vst.msk [vmem:[#allocation2] sm:$0x1] %vm336, %v335
        // Predicated region
        $region49: #{tpu_custom_call.1} parent=39 // pred_check
          %p338 = pneg %p261
        $region50: #{tpu_custom_call.1} parent=39 // pred_check_branch
          %340 = sbr.rel (%p338) target = $region52
        $region51: #{tpu_custom_call.1} parent=39 // pred_region
          %v341 = vld [vmem:[#allocation2] sm:$0x1]
          %v342 = vmul.f32 %v341, 0.00390625
          %v343 = vld [vmem:[%s1] sm:$0xff]
          %v344 = vld [vmem:[%s1 + $0x8] sm:$0xff]
          %v345 = vld [vmem:[%s2] sm:$0x1]
          %vm346 = vcmask 130048
          %v348 = vsel %vm346, %v342, 0
          %350 = vmatpush.msra.mxu0 0.0
          %351 = vmatpush.msra.mxu0 0.0
          %352 = vmatpush.msra.mxu0 0.0
          %353 = vmatpush.msra.mxu0 0.0
          %354 = vmatpush.msra.mxu0 0.0
          %355 = vmatpush.msra.mxu0 0.0
          %356 = vmatpush.msra.mxu0 0.0
          %357 = vmatpush.msra.mxu0 0.0
          %358 = vmatpush.msra.mxu0 0.0
          %359 = vmatpush.msra.mxu0 0.0
          %360 = vmatpush.msra.mxu0 0.0
          %361 = vmatpush.msra.mxu0 0.0
          %362 = vmatpush.msra.mxu0 0.0
          %363 = vmatpush.msra.mxu0 0.0
          %364 = vmatpush.msra.mxu0 %v344
          %365 = vmatpush.msra.mxu0 %v343
          %366 = vmatmul.f32.gmra.mxu0 %v348
          %v367 = vpop.f32.mrf.mxu0
          %v368 = vadd.f32 %v345, %v367
          %369 = vdwg.mxu0
          %v370 = vmax.f32 %v368, 0.0
          %v371 = vld [vmem:[%s3] sm:$0xf]
          %v372 = vld [vmem:[%s4] sm:$0x1]
          %vm373 = vcmask 31744
          %v375 = vsel %vm373, %v370, 0
          %vm377 = vcmask 1043456
          %v379 = vsel %vm377, %v371, 0
          %381 = vmatpush.msra.mxu0 0.0
          %382 = vmatpush.msra.mxu0 0.0
          %383 = vmatpush.msra.mxu0 0.0
          %384 = vmatpush.msra.mxu0 0.0
          %385 = vmatpush.msra.mxu0 0.0
          %386 = vmatpush.msra.mxu0 0.0
          %387 = vmatpush.msra.mxu0 0.0
          %388 = vmatpush.msra.mxu0 0.0
          %389 = vmatpush.msra.mxu0 0.0
          %390 = vmatpush.msra.mxu0 0.0
          %391 = vmatpush.msra.mxu0 0.0
          %392 = vmatpush.msra.mxu0 0.0
          %393 = vmatpush.msra.mxu0 0.0
          %394 = vmatpush.msra.mxu0 0.0
          %395 = vmatpush.msra.mxu0 0.0
          %396 = vmatpush.msra.mxu0 %v379
          %397 = vmatmul.f32.gmra.mxu0 %v375
          %v398 = vpop.f32.mrf.mxu0
          %v399 = vadd.f32 %v372, %v398
          %400 = vdwg.mxu0
          %v401 = vxor.u32 %v399, 2147483648
          %v402 = vmul.f32 %v401, 1.442695
          %v403 = vpow.pop %v402
          %v404 = vadd.f32 %v403, 1.0
          %v405 = vrcp.pop %v404
          %v406 = vmul.f32 %v404, %v405
          %v407 = vsub.f32 1.0, %v406
          %v408 = vmul.f32 %v405, %v407
          %v409 = vadd.f32 %v405, %v408
          %vm410 = vweird.f32 %v404
          %vm411 = vweird.f32 %v405
          %vm412 = vmor %vm410, %vm411
          %v413 = vsel %vm412, %v405, %v409
          %v414 = vand.u32 2147483647, %v404
          %vm415 = vcmp.eq.f32.partialorder %v414, 8.507059e+37
          %v416 = vand.u32 %v404, 2147483648
          %v417 = vor.u32 1.1754944e-38, %v416
          %v418 = vsel %vm415, %v417, %v413
          %v419 = vmul.f32 1.0, %v418
          %420 = vst.msk [vmem:[%s259] sm:$0x1] %vm336, %v419
        $region52: #{tpu_custom_call.1} parent=39 // pred_fallthru
          _
        %s421 = sand.u32 %s154, 1
        %s422 = scalar_lea.sflag [#allocation5], %s421
        %s423 = sand.u32 %s154, 1
        %s424 = scalar_lea.vmem [#allocation6], %s423
        // Predicated region
        $region53: #{tpu_custom_call.1} parent=39 // pred_check
          %p425 = pneg %p164
        $region54: #{tpu_custom_call.1} parent=39 // pred_check_branch
          %427 = sbr.rel (%p425) target = $region56
        $region55: #{tpu_custom_call.1} parent=39 // pred_region
          %429 = vsyncadd %s422, 0
          %s430 = scalar_lea.hbm %s5, %s26
          %s432 = sshll.u32 %s424, 4
          %s433 = int_to_ptr.vmem [resolvable:$true] %s432
          %s434 = sshll.u32 %s430, 4
          %s435 = int_to_ptr.hbm [resolvable:$true] %s434
          %437 = dma.vmem_to_hbm [thread:$0]  %s433, 16, %s435, %s422
        $region56: #{tpu_custom_call.1} parent=39 // pred_fallthru
          _
      $region40: #{tpu_custom_call.1} parent=5 // pred_fallthru
        _
      %p438 = scmp.le.s32.totalorder 2, %s17
      // Predicated region
      $region57: #{tpu_custom_call.1} parent=5 // pred_check
        %p439 = pneg %p438
      $region58: #{tpu_custom_call.1} parent=5 // pred_check_branch
        %441 = sbr.rel (%p439) target = $region60
      $region59: #{tpu_custom_call.1} parent=5 // pred_region
        %s442 = ssub.s32 %s17, 2
        // Predicated region
        $region61: #{tpu_custom_call.1} parent=59 // pred_check
          %p443 = pneg %p170
        $region62: #{tpu_custom_call.1} parent=59 // pred_check_branch
          %445 = sbr.rel (%p443) target = $region64
        $region63: #{tpu_custom_call.1} parent=59 // pred_region
          %s446 = sand.u32 %s155, 1
          %s447 = scalar_lea.sflag [#allocation5], %s446
          %s448 = sand.u32 %s155, 1
          %s449 = scalar_lea.vmem [#allocation6], %s448
          %451 = dma.done %s447, 16
        $region64: #{tpu_custom_call.1} parent=59 // pred_fallthru
          _
      $region60: #{tpu_custom_call.1} parent=5 // pred_fallthru
        _
    $region6: #{tpu_custom_call.1} parent=1 // loop_footer
      %s21 = sadd.s32 1, %s17
    $region7: #{tpu_custom_call.1} parent=1 // loop_footer_branch
      %16 = sbr.rel target = $region3
    $region8: #{tpu_custom_call.1} parent=1 // loop_exit
      _
    %452 = vsyncpa [#allocation4], 1
    %s453 = scalar_lea.sflag [#allocation4], 1
    %454 = vsyncpa %s453, 1
    %455 = vsyncpa [#allocation5], 1
    %s456 = scalar_lea.sflag [#allocation5], 1
    %457 = vsyncpa %s456, 1

</llo_original>
